<compile_context>
chip_gen: v5e
topology: v5e:2x2
jax: 0.10.0
libtpu: 0.0.40
codegen_flags: <defaults>
</compile_context>

<pallas_src>
import jax
import jax.numpy as jnp
from jax.experimental import pallas as pl
from jax.experimental.pallas import tpu as pltpu


def _round_up(n: int, m: int) -> int:
    return ((n + m - 1) // m) * m


def _equine_forward_kernel(x_ref, w_emb_ref, b_emb_ref, w_head_ref, b_head_ref, o_ref):
    # embedding_model: Linear (bf16 MXU inputs, f32 accumulation) + bias + ReLU (f32 VPU).
    h = jnp.dot(x_ref[...], w_emb_ref[...], preferred_element_type=jnp.float32)
    h = jnp.maximum(h + b_emb_ref[...], 0.0)            # (1, H) bias broadcasts over rows
    # head (head_layers = 1): Linear.  Cast activations back to bf16 to feed the MXU.
    out = jnp.dot(h.astype(w_head_ref.dtype), w_head_ref[...],
                  preferred_element_type=jnp.float32)
    o_ref[...] = (out + b_head_ref[...]).astype(o_ref.dtype)


def prepare_equine_params(w_emb, b_emb, w_head, b_head):
    """One-time parameter prep (hoisted out of the per-call path).

    Weights are pre-transposed to (in, out) (PyTorch nn.Linear stores (out, in)) and cast to
    bf16 for the MXU; biases are kept in f32 for the VPU epilogue.
    """
    bf16, f32 = jnp.bfloat16, jnp.float32
    H = w_emb.shape[1]
    C = w_head.shape[1]
    return (w_emb.astype(bf16),
            jnp.reshape(b_emb, (1, H)).astype(f32),
            w_head.astype(bf16),
            jnp.reshape(b_head, (1, C)).astype(f32))


def equine_forward(x, w_emb, b_emb, w_head, b_head, *, tile_batch=None,
                   out_dtype=jnp.bfloat16):
    """Fused  ReLU(x @ w_emb + b_emb) @ w_head + b_head.

    x: (B, F);  w_emb: (F, H) bf16;  b_emb: (1, H) f32;  w_head: (H, C) bf16;  b_head: (1, C) f32
    (use prepare_equine_params once to produce the weight/bias operands).
    """
    B, F = x.shape
    H = w_emb.shape[1]
    C = w_head.shape[1]

    bf16 = jnp.bfloat16
    x_b = x.astype(bf16)

    # ---- batch padding: only to the bf16 sublane multiple (<= 15 wasted rows) --------------
    Bp = _round_up(B, 16)
    if Bp != B:
        x_b = jnp.pad(x_b, ((0, Bp - B), (0, 0)))

    # ---- batch tile: large default (amortize ~0.35us/step), 16-aligned, ragged last block --
    if tile_batch is None:
        tile_batch = 1024
    tb = min(_round_up(max(tile_batch, 16), 16), Bp)
    # Give the "parallel" grid enough depth to shard across v7x's two TensorCores and keep
    # the pipeline busy for mid-size batches.
    while tb > 256 and pl.cdiv(Bp, tb) < 4:
        tb //= 2
    grid = (pl.cdiv(Bp, tb),)

    # ---- VMEM budget: double-buffered x/out tiles + resident (constant index_map) weights --
    vmem_bytes = (
        2 * tb * F * 2              # x tile, bf16, double-buffered
        + 2 * tb * C * 2            # out tile, bf16, double-buffered
        + (F * H + H * C) * 2       # resident bf16 weights (DMA'd once; one live buffer)
        + (H + C) * 4               # f32 biases
        + tb * (H + C) * 4          # f32 intermediates inside the body
    )
    vmem_limit = int(min(max(vmem_bytes + (4 << 20), 32 << 20), 64 << 20))

    cost = pl.CostEstimate(
        flops=2 * Bp * (F * H + H * C),
        transcendentals=0,
        bytes_accessed=(Bp * F * 2 + (F * H + H * C) * 2 + (H + C) * 4 + Bp * C * 2),
    )

    out_p = pl.pallas_call(
        _equine_forward_kernel,
        out_shape=jax.ShapeDtypeStruct((Bp, C), out_dtype),
        grid_spec=pltpu.PrefetchScalarGridSpec(
            num_scalar_prefetch=0,
            grid=grid,
            in_specs=[
                pl.BlockSpec((tb, F), lambda i: (i, 0)),   # activations: only batch is tiled
                pl.BlockSpec((F, H), lambda i: (0, 0)),    # weights stay resident (one DMA)
                pl.BlockSpec((1, H), lambda i: (0, 0)),
                pl.BlockSpec((H, C), lambda i: (0, 0)),
                pl.BlockSpec((1, C), lambda i: (0, 0)),
            ],
            out_specs=pl.BlockSpec((tb, C), lambda i: (i, 0)),   # unpadded C, bf16 writeback
        ),
        compiler_params=pltpu.CompilerParams(
            dimension_semantics=("parallel",),
            vmem_limit_bytes=vmem_limit,
        ),
        cost_estimate=cost,
    )(x_b, w_emb, b_emb, w_head, b_head)

    return out_p[:B]   # drop the (<16-row) batch padding; no lane slicing needed


def equine_forward_ref(x, w_emb, b_emb, w_head, b_head):
    # Pure-JAX reference mirroring the kernel's bf16 MXU inputs / f32 accumulation / bf16 out.
    f32, bf16 = jnp.float32, jnp.bfloat16
    xb = x.astype(bf16).astype(f32)
    web = w_emb.astype(bf16).astype(f32)
    whb = w_head.astype(bf16).astype(f32)
    h = jnp.maximum(xb @ web + jnp.reshape(b_emb, (1, -1)).astype(f32), 0.0)
    h = h.astype(bf16).astype(f32)
    out = h @ whb + jnp.reshape(b_head, (1, -1)).astype(f32)
    return out.astype(bf16)


if __name__ == "__main__":
    # Small shapes consistent with the module: batch=8, features=16, hidden=32, classes=8.
    B, F, H, C = 8, 16, 32, 8

    key = jax.random.PRNGKey(0)
    k_x, k_we, k_be, k_wh, k_bh = jax.random.split(key, 5)

    x = jax.random.normal(k_x, (B, F), dtype=jnp.float32)

    # Deterministic parameter init (stored transposed (in, out) so the kernel does X @ W).
    w_emb = jax.random.normal(k_we, (F, H), dtype=jnp.float32) * (1.0 / jnp.sqrt(F))
    b_emb = jax.random.normal(k_be, (1, H), dtype=jnp.float32) * 0.01
    w_head = jax.random.normal(k_wh, (H, C), dtype=jnp.float32) * (1.0 / jnp.sqrt(H))
    b_head = jax.random.normal(k_bh, (1, C), dtype=jnp.float32) * 0.01

    # Parameter prep (bf16 casts / bias reshape) runs once, outside the per-call path.
    params = prepare_equine_params(w_emb, b_emb, w_head, b_head)

    out = jax.block_until_ready(equine_forward(x, *params))
    ref = equine_forward_ref(x, w_emb, b_emb, w_head, b_head)

    assert out.shape == (B, C)
    # Both paths round their bf16 MXU inputs and the bf16 result identically; only f32
    # accumulation order differs, so a modest tolerance suffices.
    assert jnp.allclose(out.astype(jnp.float32), ref.astype(jnp.float32),
                        atol=1e-2, rtol=1e-2), "mismatch vs. pure-JAX reference"

    print("KERNEL_OK")
</pallas_src>

<mosaic_0001>
module attributes {stable_mosaic.version = 11 : i64} {
  func.func @_equine_forward_kernel(%arg0: i32, %arg1: memref<16x16xbf16, #tpu.memory_space<vmem>>, %arg2: memref<16x32xbf16, #tpu.memory_space<vmem>>, %arg3: memref<1x32xf32, #tpu.memory_space<vmem>>, %arg4: memref<32x8xbf16, #tpu.memory_space<vmem>>, %arg5: memref<1x8xf32, #tpu.memory_space<vmem>>, %arg6: memref<16x8xbf16, #tpu.memory_space<vmem>>) attributes {dimension_semantics = [#tpu.dimension_semantics<parallel>], iteration_bounds = array<i64: 1>, scalar_prefetch = 0 : i64, scratch_operands = 0 : i64, tpu.core_type = #tpu.core_type<tc>, window_params = [{transform_indices = @transform_0, window_bounds = array<i64: 16, 16>}, {pipeline_mode = #tpu.pipeline_mode<synchronous>, transform_indices = @transform_1, window_bounds = array<i64: 16, 32>}, {pipeline_mode = #tpu.pipeline_mode<synchronous>, transform_indices = @transform_2, window_bounds = array<i64: 1, 32>}, {pipeline_mode = #tpu.pipeline_mode<synchronous>, transform_indices = @transform_3, window_bounds = array<i64: 32, 8>}, {pipeline_mode = #tpu.pipeline_mode<synchronous>, transform_indices = @transform_4, window_bounds = array<i64: 1, 8>}, {transform_indices = @transform_5, window_bounds = array<i64: 16, 8>}]} {
    %c0 = arith.constant 0 : index
    %c0_0 = arith.constant 0 : index
    %0 = vector.load %arg1[%c0, %c0_0] : memref<16x16xbf16, #tpu.memory_space<vmem>>, vector<16x16xbf16>
    %c0_1 = arith.constant 0 : index
    %c0_2 = arith.constant 0 : index
    %1 = vector.load %arg2[%c0_1, %c0_2] : memref<16x32xbf16, #tpu.memory_space<vmem>>, vector<16x32xbf16>
    %cst = arith.constant dense<0.000000e+00> : vector<16x32xf32>
    %2 = tpu.matmul %0, %1, %cst {dimension_numbers = #tpu.dot_dimension_numbers<[1], [0], [0], [1], [0, 0, 1, 1], [], []>} : vector<16x16xbf16>, vector<16x32xbf16>, vector<16x32xf32> -> vector<16x32xf32>
    %c0_3 = arith.constant 0 : index
    %c0_4 = arith.constant 0 : index
    %3 = vector.load %arg3[%c0_3, %c0_4] : memref<1x32xf32, #tpu.memory_space<vmem>>, vector<1x32xf32>
    %4 = vector.broadcast %3 : vector<1x32xf32> to vector<16x32xf32>
    %5 = arith.addf %2, %4 : vector<16x32xf32>
    %cst_5 = arith.constant 0.000000e+00 : f32
    %6 = vector.broadcast %cst_5 : f32 to vector<16x32xf32>
    %7 = arith.maximumf %5, %6 : vector<16x32xf32>
    %8 = arith.truncf %7 : vector<16x32xf32> to vector<16x32xbf16>
    %c0_6 = arith.constant 0 : index
    %c0_7 = arith.constant 0 : index
    %9 = vector.load %arg4[%c0_6, %c0_7] : memref<32x8xbf16, #tpu.memory_space<vmem>>, vector<32x8xbf16>
    %cst_8 = arith.constant dense<0.000000e+00> : vector<16x8xf32>
    %10 = tpu.matmul %8, %9, %cst_8 {dimension_numbers = #tpu.dot_dimension_numbers<[1], [0], [0], [1], [0, 0, 1, 1], [], []>} : vector<16x32xbf16>, vector<32x8xbf16>, vector<16x8xf32> -> vector<16x8xf32>
    %c0_9 = arith.constant 0 : index
    %c0_10 = arith.constant 0 : index
    %11 = vector.load %arg5[%c0_9, %c0_10] : memref<1x8xf32, #tpu.memory_space<vmem>>, vector<1x8xf32>
    %12 = vector.broadcast %11 : vector<1x8xf32> to vector<16x8xf32>
    %13 = arith.addf %10, %12 : vector<16x8xf32>
    %14 = arith.truncf %13 : vector<16x8xf32> to vector<16x8xbf16>
    %c0_11 = arith.constant 0 : index
    %c0_12 = arith.constant 0 : index
    %15 = vector.load %arg6[%c0_11, %c0_12] : memref<16x8xbf16, #tpu.memory_space<vmem>>, vector<16x8xbf16>
    tpu.vector_store %arg6[%c0_11, %c0_12], %14 {strides = array<i32>} : memref<16x8xbf16, #tpu.memory_space<vmem>>, vector<16x8xbf16>,
    return
  }
  func.func @transform_0(%arg0: i32) -> (i32, i32) {
    %c0_i32 = arith.constant 0 : i32
    %c0_i32_0 = arith.constant 0 : i32
    return %arg0, %c0_i32 : i32, i32
  }
  func.func @transform_1(%arg0: i32) -> (i32, i32) {
    %c0_i32 = arith.constant 0 : i32
    %c0_i32_0 = arith.constant 0 : i32
    %c0_i32_1 = arith.constant 0 : i32
    return %c0_i32, %c0_i32_0 : i32, i32
  }
  func.func @transform_2(%arg0: i32) -> (i32, i32) {
    %c0_i32 = arith.constant 0 : i32
    %c0_i32_0 = arith.constant 0 : i32
    %c0_i32_1 = arith.constant 0 : i32
    return %c0_i32, %c0_i32_0 : i32, i32
  }
  func.func @transform_3(%arg0: i32) -> (i32, i32) {
    %c0_i32 = arith.constant 0 : i32
    %c0_i32_0 = arith.constant 0 : i32
    %c0_i32_1 = arith.constant 0 : i32
    return %c0_i32, %c0_i32_0 : i32, i32
  }
  func.func @transform_4(%arg0: i32) -> (i32, i32) {
    %c0_i32 = arith.constant 0 : i32
    %c0_i32_0 = arith.constant 0 : i32
    %c0_i32_1 = arith.constant 0 : i32
    return %c0_i32, %c0_i32_0 : i32, i32
  }
  func.func @transform_5(%arg0: i32) -> (i32, i32) {
    %c0_i32 = arith.constant 0 : i32
    %c0_i32_0 = arith.constant 0 : i32
    return %arg0, %c0_i32 : i32, i32
  }
}

</mosaic_0001>

<llo_original>
// kernel: tpu_custom_call.1
$region0: #{tpu_custom_call.1}
  #allocation0 [shape = 'u32[]', space=smem, size = 0x4, offset = 0x4, fixed_abs, tag = 'smem constant byte address 0x4 - core index']
  #allocation1 [shape = 'u32[72,128]{1,0:T(1,128)}', space=vmem, size = 0x9000, scoped, tag = 'internal scratch']
  %s0 = inlined_call_operand.vmem [shape: bf16[16,16], index: 0, kind: input, shape index: {}]
  %s1 = inlined_call_operand.vmem [shape: bf16[16,32], index: 1, kind: input, shape index: {}]
  %s2 = inlined_call_operand.vmem [shape: f32[1,32], index: 2, kind: input, shape index: {}]
  %s3 = inlined_call_operand.vmem [shape: bf16[32,8], index: 3, kind: input, shape index: {}]
  %s4 = inlined_call_operand.vmem [shape: f32[1,8], index: 4, kind: input, shape index: {}]
  %s5 = inlined_call_operand.vmem [shape: bf16[16,8], index: 5, kind: output, shape index: {}]
  %s6 = sld [smem:[#allocation0]]
  $region30: #{tpu_custom_call.1} parent=0
    _
  %s8 = ssub.s32 1, %s6
  %s9 = scalar_select 0, %s8, %s6
  // Predicated region
  $region2: #{tpu_custom_call.1} parent=0 // pred_check
    _
  $region3: #{tpu_custom_call.1} parent=0 // pred_check_branch
    %11 = sbr.rel (0) target = $region5
  $region4: #{tpu_custom_call.1} parent=0 // pred_region
    _
  $region5: #{tpu_custom_call.1} parent=0 // pred_fallthru
    _
  // Predicated region
  $region6: #{tpu_custom_call.1} parent=0 // pred_check
    _
  $region7: #{tpu_custom_call.1} parent=0 // pred_check_branch
    %13 = sbr.rel (0) target = $region9
  $region8: #{tpu_custom_call.1} parent=0 // pred_region
    _
  $region9: #{tpu_custom_call.1} parent=0 // pred_fallthru
    _
  // Predicated region
  $region10: #{tpu_custom_call.1} parent=0 // pred_check
    _
  $region11: #{tpu_custom_call.1} parent=0 // pred_check_branch
    %15 = sbr.rel (0) target = $region13
  $region12: #{tpu_custom_call.1} parent=0 // pred_region
    _
  $region13: #{tpu_custom_call.1} parent=0 // pred_fallthru
    _
  // Predicated region
  $region14: #{tpu_custom_call.1} parent=0 // pred_check
    _
  $region15: #{tpu_custom_call.1} parent=0 // pred_check_branch
    %17 = sbr.rel (0) target = $region17
  $region16: #{tpu_custom_call.1} parent=0 // pred_region
    _
  $region17: #{tpu_custom_call.1} parent=0 // pred_fallthru
    _
  // Predicated region
  $region18: #{tpu_custom_call.1} parent=0 // pred_check
    _
  $region19: #{tpu_custom_call.1} parent=0 // pred_check_branch
    %19 = sbr.rel (0) target = $region21
  $region20: #{tpu_custom_call.1} parent=0 // pred_region
    _
  $region21: #{tpu_custom_call.1} parent=0 // pred_fallthru
    _
  %v21 = vld [vmem:[%s0] sm:$0xf]
  %v22 = vld [vmem:[%s0 + $0x4] sm:$0xf]
  %v23 = vld [vmem:[%s1] sm:$0xf]
  %v24 = vld [vmem:[%s1 + $0x4] sm:$0xf]
  %v25 = vld [vmem:[%s2] sm:$0x1]
  %v27 = vperm.slane %v25, 0
  %v31 = vunpack.c.l.b16 %v21
  %v32 = vunpack.c.l.b16 %v22
  %v33 = vpack.c.b16 %v32, %v31
  %v36 = vunpack.c.l.b16 %v23
  %v37 = vunpack.c.l.b16 %v24
  %v38 = vpack.c.b16 %v37, %v36
  %vm40 = vcmask 130048
  %v42 = vsel %vm40, %v33, 0
  %44 = vmatpush.bf16.msra.mxu0 0
  %45 = vmatpush.bf16.msra.mxu0 0
  %46 = vmatpush.bf16.msra.mxu0 0
  %47 = vmatpush.bf16.msra.mxu0 0
  %48 = vmatpush.bf16.msra.mxu0 0
  %49 = vmatpush.bf16.msra.mxu0 0
  %50 = vmatpush.bf16.msra.mxu0 0
  %51 = vmatpush.bf16.msra.mxu0 %v38
  %52 = vmatmul.bf16.gmra.mxu0 %v42
  %v53 = vpop.f32.mrf.mxu0
  %v54 = vadd.f32 %v27, %v53
  %v55 = vpop.f32.mrf.mxu0
  %v56 = vadd.f32 %v27, %v55
  %57 = vdwg.mxu0
  %v58 = vmax.f32 %v54, 0.0
  %v59 = vmax.f32 %v56, 0.0
  %v60 = vpack.c.bf16 %v59, %v58
  %v61 = vld [vmem:[%s3] sm:$0xf]
  %v62 = vld [vmem:[%s3 + $0x4] sm:$0xf]
  %v63 = vld [vmem:[%s3 + $0x8] sm:$0xf]
  %v64 = vld [vmem:[%s3 + $0xc] sm:$0xf]
  %v65 = vld [vmem:[%s4] sm:$0x1]
  %v67 = vperm.slane %v65, 0
  %v73 = vunpack.c.l.b16 %v61
  %v74 = vunpack.c.l.b16 %v62
  %v75 = vunpack.c.l.b16 %v63
  %v76 = vunpack.c.l.b16 %v64
  %v77 = vpack.c.b16 %v74, %v73
  %v78 = vpack.c.b16 %v76, %v75
  %vm81 = vcmask 261120
  %v83 = vsel %vm81, %v60, 0
  %85 = vmatpush.bf16.msra.mxu0 0
  %86 = vmatpush.bf16.msra.mxu0 0
  %87 = vmatpush.bf16.msra.mxu0 0
  %88 = vmatpush.bf16.msra.mxu0 0
  %89 = vmatpush.bf16.msra.mxu0 0
  %90 = vmatpush.bf16.msra.mxu0 0
  %91 = vmatpush.bf16.msra.mxu0 %v78
  %92 = vmatpush.bf16.msra.mxu0 %v77
  %93 = vmatmul.bf16.gmra.mxu0 %v83
  %v94 = vpop.f32.mrf.mxu0
  %v95 = vadd.f32 %v67, %v94
  %v96 = vpop.f32.mrf.mxu0
  %v97 = vadd.f32 %v67, %v96
  %98 = vdwg.mxu0
  %v99 = vpack.c.bf16 %v95, %v95
  %v100 = vpack.c.bf16 %v97, %v97
  %vm101 = vcmask 60416
  %102 = vst.msk [vmem:[%s5] sm:$0xf] %vm101, %v99
  %103 = vst.msk [vmem:[%s5 + $0x4] sm:$0xf] %vm101, %v100
  // Predicated region
  $region22: #{tpu_custom_call.1} parent=0 // pred_check
    _
  $region23: #{tpu_custom_call.1} parent=0 // pred_check_branch
    %105 = sbr.rel (0) target = $region25
  $region24: #{tpu_custom_call.1} parent=0 // pred_region
    _
  $region25: #{tpu_custom_call.1} parent=0 // pred_fallthru
    _
  // Predicated region
  $region26: #{tpu_custom_call.1} parent=0 // pred_check
    _
  $region27: #{tpu_custom_call.1} parent=0 // pred_check_branch
    %107 = sbr.rel (0) target = $region29
  $region28: #{tpu_custom_call.1} parent=0 // pred_region
    _
  $region29: #{tpu_custom_call.1} parent=0 // pred_fallthru
    _

</llo_original>
